<compile_context>
chip_gen: v5e
topology: v5e:2x2
jax: 0.10.0
libtpu: 0.0.40
codegen_flags: <defaults>
</compile_context>

<pallas_src>
import jax
import jax.numpy as jnp
from jax.experimental import pallas as pl
from jax.experimental.pallas import tpu as pltpu

_LANES = 128                 # vreg lane width
_DEFAULT_TILE_ROWS = 4096    # 4096*128*4B = 2 MiB per f32 input block


def _round_up(x, m):
    return -(-x // m) * m


def _make_loss_stats_kernel(tile, rows, tiles_per_core, needs_mask, fold_sub):
    """Kernel closure over static tiling parameters."""

    def kernel(pred_ref, tgt_ref, out_ref):
        c = pl.program_id(0)   # core-split axis ("parallel")
        i = pl.program_id(1)   # reduction axis  ("arbitrary")

        p = pred_ref[...].astype(jnp.float32)
        t = tgt_ref[...].astype(jnp.float32)

        if needs_mask:
            # Mask rows past the real row count: covers the partial last block
            # and the fully-dead phantom block of the odd core (its index_map
            # is clamped, but its unclamped start row is >= rows -> all masked).
            row_ids = jax.lax.broadcasted_iota(jnp.int32, (tile, _LANES), 0)
            start_row = (c * tiles_per_core + i) * tile        # unclamped
            valid = (start_row + row_ids) < rows
            tmask = jnp.logical_and(t > 0.0, valid)
            sel = jnp.where(tmask, p, 1.0 - p)
            sel = jnp.where(valid, sel, 1.0)                   # log(1)=0 -> dead rows add 0
        else:
            tmask = t > 0.0
            sel = jnp.where(tmask, p, 1.0 - p)

        # One-log BCE with PyTorch's log clamp at -100.  We accumulate the SUM
        # of clamped logs and negate once in the glue JAX.
        logsel = jnp.maximum(jnp.log(sel), -100.0)

        diff = p - t
        sq = jnp.where(tmask, diff * diff, 0.0)
        cnt = tmask.astype(jnp.float32)

        if fold_sub == 8:
            # (tile,128) -> (tile//8, 8, 128) is layout-preserving (each (8,128)
            # chunk is one vreg tile); the sum over the leading axis is plain
            # vreg-wise VPU adds -- no per-step XLU reduction.
            def fold(x):
                return jnp.sum(x.reshape(tile // 8, 8, _LANES), axis=0)
        else:
            # Tiny single-block case: one sublane reduction, cost irrelevant.
            def fold(x):
                return jnp.sum(x, axis=0, keepdims=True)

        b_part = fold(logsel)
        s_part = fold(sq)
        c_part = fold(cnt)

        # Accumulate directly into the output block (resident across axis 1).
        @pl.when(i == 0)
        def _init():
            out_ref[0, 0] = b_part
            out_ref[0, 1] = s_part
            out_ref[0, 2] = c_part

        @pl.when(i != 0)
        def _accumulate():
            out_ref[0, 0] += b_part
            out_ref[0, 1] += s_part
            out_ref[0, 2] += c_part

    return kernel


def yolo_inspired_glucose_loss(predictions, targets, alpha=1.0, betha=1.0,
                               tile_rows=_DEFAULT_TILE_ROWS):
    assert predictions.shape == targets.shape
    n_total = int(predictions.size)   # static

    def _flat(x):
        x = x.reshape(-1)
        # Keep bf16 as-is (half the HBM bytes); upcast to f32 on the VPU
        # inside the kernel.  Anything else is promoted to f32.
        if x.dtype != jnp.float32 and x.dtype != jnp.bfloat16:
            x = x.astype(jnp.float32)
        return x

    p = _flat(predictions)
    t = _flat(targets)

    # Lane-dense layout: (rows, 128).  Reshape is free when n_total % 128 == 0.
    rows = _round_up(n_total, _LANES) // _LANES
    n128 = rows * _LANES
    if n128 != n_total:
        # Pad only to the next 128 multiple.  Padded p=0, t=0 contribute exactly
        # 0 to all three sums (sel=1 -> log=0; mask False -> no sq/count).
        # TODO(synk): this still copies both arrays once; a memory_space=pl.ANY
        # flat input + manual chunk DMA (P4) would remove even this copy.
        p = jnp.pad(p, (0, n128 - n_total))
        t = jnp.pad(t, (0, n128 - n_total))
    p2 = p.reshape(rows, _LANES)
    t2 = t.reshape(rows, _LANES)

    if rows <= tile_rows:
        tile = rows                         # single block == full extent (always legal)
    else:
        tile = _round_up(tile_rows, 16)     # bf16-safe sublane multiple

    total_blocks = pl.cdiv(rows, tile)
    ncores = 2 if total_blocks >= 2 else 1  # v7x: 2 TensorCores; no-op on v5e/v6e
    tiles_per_core = pl.cdiv(total_blocks, ncores)
    needs_mask = (rows % tile != 0) or (total_blocks % ncores != 0)
    fold_sub = 8 if tile % 8 == 0 else 1
    last_block = total_blocks - 1

    def in_index_map(c, i):
        blk = c * tiles_per_core + i
        # Clamp the phantom block of the odd core to a legal block; its
        # contribution is zeroed by the in-kernel validity mask.
        return (jnp.minimum(blk, last_block), 0)

    kernel = _make_loss_stats_kernel(tile, rows, tiles_per_core, needs_mask, fold_sub)

    bytes_accessed = (p2.dtype.itemsize + t2.dtype.itemsize) * rows * _LANES \
        + 4 * ncores * 3 * fold_sub * _LANES

    partial = pl.pallas_call(
        kernel,
        out_shape=jax.ShapeDtypeStruct((ncores, 3, fold_sub, _LANES), jnp.float32),
        grid_spec=pltpu.PrefetchScalarGridSpec(
            num_scalar_prefetch=0,
            grid=(ncores, tiles_per_core),
            in_specs=[
                pl.BlockSpec((tile, _LANES), in_index_map),
                pl.BlockSpec((tile, _LANES), in_index_map),
            ],
            out_specs=pl.BlockSpec((1, 3, fold_sub, _LANES),
                                   lambda c, i: (c, 0, 0, 0)),
        ),
        compiler_params=pltpu.CompilerParams(
            dimension_semantics=("parallel", "arbitrary")),
        cost_estimate=pl.CostEstimate(
            flops=10 * rows * _LANES,
            transcendentals=rows * _LANES,
            bytes_accessed=bytes_accessed),
    )(p2, t2)

    # Glue JAX: reduce the tiny per-core partials and combine.
    stats = jnp.sum(partial, axis=(0, 2, 3))       # [sum(log_sel), sum(sq), count]
    range_loss = -stats[0] / jnp.float32(n_total)  # single negation here
    cnt = stats[2]
    value_loss = jnp.where(cnt > 0.0, stats[1] / jnp.maximum(cnt, 1.0), 0.0)
    return alpha * range_loss + betha * value_loss


def _reference_loss(predictions, targets, alpha=1.0, betha=1.0):
    # Pure-JAX reference mirroring the PyTorch module.
    p = predictions.astype(jnp.float32)
    t = targets.astype(jnp.float32)
    tr = (t > 0.0).astype(jnp.float32)
    log_p = jnp.maximum(jnp.log(p), -100.0)
    log_1mp = jnp.maximum(jnp.log(1.0 - p), -100.0)
    range_loss = jnp.mean(-(tr * log_p + (1.0 - tr) * log_1mp))
    mask = t > 0.0
    cnt = jnp.sum(mask.astype(jnp.float32))
    sq_sum = jnp.sum(jnp.where(mask, (p - t) ** 2, 0.0))
    value_loss = jnp.where(cnt > 0.0, sq_sum / jnp.maximum(cnt, 1.0), 0.0)
    return alpha * range_loss + betha * value_loss


def _make_inputs(key, B, N, dtype=jnp.float32):
    k1, k2, k3 = jax.random.split(key, 3)
    preds = jax.nn.sigmoid(jax.random.normal(k1, (B, N), dtype=jnp.float32))
    idx = jax.random.randint(k2, (B,), 0, N)
    vals = jax.random.uniform(k3, (B,), minval=0.1, maxval=1.0, dtype=jnp.float32)
    tgts = jnp.zeros((B, N), dtype=jnp.float32).at[jnp.arange(B), idx].set(vals)
    return preds.astype(dtype), tgts.astype(dtype)


if __name__ == "__main__":
    key = jax.random.PRNGKey(0)
    k1, k2, k3, k4 = jax.random.split(key, 4)

    # Test 1: module-sized small shape (batch=8, num_ranges=16); n % 128 == 0
    # -> zero-copy path, single full-extent block.
    preds, tgts = _make_inputs(k1, 8, 16)
    loss = yolo_inspired_glucose_loss(preds, tgts, alpha=1.0, betha=1.0)
    jax.block_until_ready(loss)
    ref = _reference_loss(preds, tgts, alpha=1.0, betha=1.0)
    assert jnp.allclose(loss, ref, rtol=1e-5, atol=1e-5), (loss, ref)

    # Test 2: non-128-aligned numel -> pad-to-next-128 + single partial-free block.
    preds2, tgts2 = _make_inputs(k2, 1000, 24)
    loss2 = yolo_inspired_glucose_loss(preds2, tgts2, alpha=0.7, betha=1.3)
    jax.block_until_ready(loss2)
    ref2 = _reference_loss(preds2, tgts2, alpha=0.7, betha=1.3)
    assert jnp.allclose(loss2, ref2, rtol=1e-5, atol=1e-5), (loss2, ref2)

    # Test 3: multi-block path (rows > tile) with odd block count -> exercises
    # the 2-core parallel split, clamped phantom block and in-kernel tail mask.
    preds3, tgts3 = _make_inputs(k3, 9000, 128)
    loss3 = yolo_inspired_glucose_loss(preds3, tgts3, alpha=0.5, betha=2.0)
    jax.block_until_ready(loss3)
    ref3 = _reference_loss(preds3, tgts3, alpha=0.5, betha=2.0)
    assert jnp.allclose(loss3, ref3, rtol=1e-4, atol=1e-5), (loss3, ref3)

    # Test 4: bf16 inputs fed without a wrapper cast (in-kernel upcast).
    preds4, tgts4 = _make_inputs(k4, 8, 16, dtype=jnp.bfloat16)
    loss4 = yolo_inspired_glucose_loss(preds4, tgts4, alpha=1.0, betha=1.0)
    jax.block_until_ready(loss4)
    ref4 = _reference_loss(preds4, tgts4, alpha=1.0, betha=1.0)
    assert jnp.allclose(loss4, ref4, rtol=1e-5, atol=1e-5), (loss4, ref4)

    print("KERNEL_OK")
</pallas_src>

<mosaic_0001>
module attributes {stable_mosaic.version = 11 : i64} {
  func.func @kernel(%arg0: i32, %arg1: i32, %arg2: memref<1x128xf32, #tpu.memory_space<vmem>>, %arg3: memref<1x128xf32, #tpu.memory_space<vmem>>, %arg4: memref<1x3x1x128xf32, #tpu.memory_space<vmem>>) attributes {dimension_semantics = [#tpu.dimension_semantics<parallel>, #tpu.dimension_semantics<arbitrary>], iteration_bounds = array<i64: 1, 1>, scalar_prefetch = 0 : i64, scratch_operands = 0 : i64, tpu.core_type = #tpu.core_type<tc>, window_params = [{transform_indices = @transform_0, window_bounds = array<i64: 1, 128>}, {transform_indices = @transform_1, window_bounds = array<i64: 1, 128>}, {transform_indices = @transform_2, window_bounds = array<i64: 1, 3, 1, 128>}]} {
    %c0 = arith.constant 0 : index
    %c0_0 = arith.constant 0 : index
    %0 = vector.load %arg2[%c0, %c0_0] : memref<1x128xf32, #tpu.memory_space<vmem>>, vector<1x128xf32>
    %c0_1 = arith.constant 0 : index
    %c0_2 = arith.constant 0 : index
    %1 = vector.load %arg3[%c0_1, %c0_2] : memref<1x128xf32, #tpu.memory_space<vmem>>, vector<1x128xf32>
    %cst = arith.constant 0.000000e+00 : f32
    %2 = vector.broadcast %cst : f32 to vector<1x128xf32>
    %3 = arith.cmpf ogt, %1, %2 : vector<1x128xf32>
    %cst_3 = arith.constant 1.000000e+00 : f32
    %4 = vector.broadcast %cst_3 : f32 to vector<1x128xf32>
    %5 = arith.subf %4, %0 : vector<1x128xf32>
    %6 = arith.select %3, %0, %5 : vector<1x128xi1>, vector<1x128xf32>
    %7 = math.log %6 : vector<1x128xf32>
    %cst_4 = arith.constant -1.000000e+02 : f32
    %8 = vector.broadcast %cst_4 : f32 to vector<1x128xf32>
    %9 = arith.maximumf %7, %8 : vector<1x128xf32>
    %10 = arith.subf %0, %1 : vector<1x128xf32>
    %11 = arith.mulf %10, %10 : vector<1x128xf32>
    %cst_5 = arith.constant 0.000000e+00 : f32
    %12 = vector.broadcast %cst_5 : f32 to vector<1x128xf32>
    %13 = arith.select %3, %11, %12 : vector<1x128xi1>, vector<1x128xf32>
    %14 = arith.extui %3 : vector<1x128xi1> to vector<1x128xi32>
    %15 = arith.sitofp %14 : vector<1x128xi32> to vector<1x128xf32>
    %cst_6 = arith.constant dense<0.000000e+00> : vector<128xf32>
    %16 = vector.multi_reduction <add>, %9, %cst_6 [0] : vector<1x128xf32> to vector<128xf32>
    %17 = vector.shape_cast %16 : vector<128xf32> to vector<1x128xf32>
    %cst_7 = arith.constant dense<0.000000e+00> : vector<128xf32>
    %18 = vector.multi_reduction <add>, %13, %cst_7 [0] : vector<1x128xf32> to vector<128xf32>
    %19 = vector.shape_cast %18 : vector<128xf32> to vector<1x128xf32>
    %cst_8 = arith.constant dense<0.000000e+00> : vector<128xf32>
    %20 = vector.multi_reduction <add>, %15, %cst_8 [0] : vector<1x128xf32> to vector<128xf32>
    %21 = vector.shape_cast %20 : vector<128xf32> to vector<1x128xf32>
    %c0_i32 = arith.constant 0 : i32
    %22 = arith.cmpi eq, %arg1, %c0_i32 : i32
    %23 = arith.extui %22 : i1 to i32
    %c0_i32_9 = arith.constant 0 : i32
    %24 = arith.cmpi ne, %23, %c0_i32_9 : i32
    scf.if %24 {
      %c0_12 = arith.constant 0 : index
      %c0_13 = arith.constant 0 : index
      %c0_14 = arith.constant 0 : index
      %c0_15 = arith.constant 0 : index
      %28 = vector.load %arg4[%c0_12, %c0_13, %c0_14, %c0_15] : memref<1x3x1x128xf32, #tpu.memory_space<vmem>>, vector<1x1x1x128xf32>
      %29 = vector.shape_cast %28 : vector<1x1x1x128xf32> to vector<1x128xf32>
      %30 = vector.shape_cast %17 : vector<1x128xf32> to vector<1x1x1x128xf32>
      tpu.vector_store %arg4[%c0_12, %c0_13, %c0_14, %c0_15], %30 {strides = array<i32>} : memref<1x3x1x128xf32, #tpu.memory_space<vmem>>, vector<1x1x1x128xf32>,
      %c0_16 = arith.constant 0 : index
      %c1 = arith.constant 1 : index
      %c0_17 = arith.constant 0 : index
      %c0_18 = arith.constant 0 : index
      %31 = vector.load %arg4[%c0_16, %c1, %c0_17, %c0_18] : memref<1x3x1x128xf32, #tpu.memory_space<vmem>>, vector<1x1x1x128xf32>
      %32 = vector.shape_cast %31 : vector<1x1x1x128xf32> to vector<1x128xf32>
      %33 = vector.shape_cast %19 : vector<1x128xf32> to vector<1x1x1x128xf32>
      tpu.vector_store %arg4[%c0_16, %c1, %c0_17, %c0_18], %33 {strides = array<i32>} : memref<1x3x1x128xf32, #tpu.memory_space<vmem>>, vector<1x1x1x128xf32>,
      %c0_19 = arith.constant 0 : index
      %c2 = arith.constant 2 : index
      %c0_20 = arith.constant 0 : index
      %c0_21 = arith.constant 0 : index
      %34 = vector.load %arg4[%c0_19, %c2, %c0_20, %c0_21] : memref<1x3x1x128xf32, #tpu.memory_space<vmem>>, vector<1x1x1x128xf32>
      %35 = vector.shape_cast %34 : vector<1x1x1x128xf32> to vector<1x128xf32>
      %36 = vector.shape_cast %21 : vector<1x128xf32> to vector<1x1x1x128xf32>
      tpu.vector_store %arg4[%c0_19, %c2, %c0_20, %c0_21], %36 {strides = array<i32>} : memref<1x3x1x128xf32, #tpu.memory_space<vmem>>, vector<1x1x1x128xf32>,
    } else {
    }
    %c0_i32_10 = arith.constant 0 : i32
    %25 = arith.cmpi ne, %arg1, %c0_i32_10 : i32
    %26 = arith.extui %25 : i1 to i32
    %c0_i32_11 = arith.constant 0 : i32
    %27 = arith.cmpi ne, %26, %c0_i32_11 : i32
    scf.if %27 {
      %c0_12 = arith.constant 0 : index
      %c0_13 = arith.constant 0 : index
      %c0_14 = arith.constant 0 : index
      %c0_15 = arith.constant 0 : index
      %28 = vector.load %arg4[%c0_12, %c0_13, %c0_14, %c0_15] : memref<1x3x1x128xf32, #tpu.memory_space<vmem>>, vector<1x1x1x128xf32>
      %29 = vector.shape_cast %28 : vector<1x1x1x128xf32> to vector<1x128xf32>
      %30 = arith.addf %29, %17 : vector<1x128xf32>
      %c0_16 = arith.constant 0 : index
      %c0_17 = arith.constant 0 : index
      %c0_18 = arith.constant 0 : index
      %c0_19 = arith.constant 0 : index
      %31 = vector.load %arg4[%c0_16, %c0_17, %c0_18, %c0_19] : memref<1x3x1x128xf32, #tpu.memory_space<vmem>>, vector<1x1x1x128xf32>
      %32 = vector.shape_cast %31 : vector<1x1x1x128xf32> to vector<1x128xf32>
      %33 = vector.shape_cast %30 : vector<1x128xf32> to vector<1x1x1x128xf32>
      tpu.vector_store %arg4[%c0_16, %c0_17, %c0_18, %c0_19], %33 {strides = array<i32>} : memref<1x3x1x128xf32, #tpu.memory_space<vmem>>, vector<1x1x1x128xf32>,
      %c0_20 = arith.constant 0 : index
      %c1 = arith.constant 1 : index
      %c0_21 = arith.constant 0 : index
      %c0_22 = arith.constant 0 : index
      %34 = vector.load %arg4[%c0_20, %c1, %c0_21, %c0_22] : memref<1x3x1x128xf32, #tpu.memory_space<vmem>>, vector<1x1x1x128xf32>
      %35 = vector.shape_cast %34 : vector<1x1x1x128xf32> to vector<1x128xf32>
      %36 = arith.addf %35, %19 : vector<1x128xf32>
      %c0_23 = arith.constant 0 : index
      %c1_24 = arith.constant 1 : index
      %c0_25 = arith.constant 0 : index
      %c0_26 = arith.constant 0 : index
      %37 = vector.load %arg4[%c0_23, %c1_24, %c0_25, %c0_26] : memref<1x3x1x128xf32, #tpu.memory_space<vmem>>, vector<1x1x1x128xf32>
      %38 = vector.shape_cast %37 : vector<1x1x1x128xf32> to vector<1x128xf32>
      %39 = vector.shape_cast %36 : vector<1x128xf32> to vector<1x1x1x128xf32>
      tpu.vector_store %arg4[%c0_23, %c1_24, %c0_25, %c0_26], %39 {strides = array<i32>} : memref<1x3x1x128xf32, #tpu.memory_space<vmem>>, vector<1x1x1x128xf32>,
      %c0_27 = arith.constant 0 : index
      %c2 = arith.constant 2 : index
      %c0_28 = arith.constant 0 : index
      %c0_29 = arith.constant 0 : index
      %40 = vector.load %arg4[%c0_27, %c2, %c0_28, %c0_29] : memref<1x3x1x128xf32, #tpu.memory_space<vmem>>, vector<1x1x1x128xf32>
      %41 = vector.shape_cast %40 : vector<1x1x1x128xf32> to vector<1x128xf32>
      %42 = arith.addf %41, %21 : vector<1x128xf32>
      %c0_30 = arith.constant 0 : index
      %c2_31 = arith.constant 2 : index
      %c0_32 = arith.constant 0 : index
      %c0_33 = arith.constant 0 : index
      %43 = vector.load %arg4[%c0_30, %c2_31, %c0_32, %c0_33] : memref<1x3x1x128xf32, #tpu.memory_space<vmem>>, vector<1x1x1x128xf32>
      %44 = vector.shape_cast %43 : vector<1x1x1x128xf32> to vector<1x128xf32>
      %45 = vector.shape_cast %42 : vector<1x128xf32> to vector<1x1x1x128xf32>
      tpu.vector_store %arg4[%c0_30, %c2_31, %c0_32, %c0_33], %45 {strides = array<i32>} : memref<1x3x1x128xf32, #tpu.memory_space<vmem>>, vector<1x1x1x128xf32>,
    } else {
    }
    return
  }
  func.func @transform_0(%arg0: i32, %arg1: i32) -> (i32, i32) {
    %c1_i32 = arith.constant 1 : i32
    %0 = arith.muli %arg0, %c1_i32 : i32
    %1 = arith.addi %0, %arg1 : i32
    %c0_i32 = arith.constant 0 : i32
    %2 = arith.minsi %1, %c0_i32 : i32
    %c0_i32_0 = arith.constant 0 : i32
    %c0_i32_1 = arith.constant 0 : i32
    return %2, %c0_i32_0 : i32, i32
  }
  func.func @transform_1(%arg0: i32, %arg1: i32) -> (i32, i32) {
    %c1_i32 = arith.constant 1 : i32
    %0 = arith.muli %arg0, %c1_i32 : i32
    %1 = arith.addi %0, %arg1 : i32
    %c0_i32 = arith.constant 0 : i32
    %2 = arith.minsi %1, %c0_i32 : i32
    %c0_i32_0 = arith.constant 0 : i32
    %c0_i32_1 = arith.constant 0 : i32
    return %2, %c0_i32_0 : i32, i32
  }
  func.func @transform_2(%arg0: i32, %arg1: i32) -> (i32, i32, i32, i32) {
    %c0_i32 = arith.constant 0 : i32
    %c0_i32_0 = arith.constant 0 : i32
    %c0_i32_1 = arith.constant 0 : i32
    %c0_i32_2 = arith.constant 0 : i32
    return %arg0, %c0_i32, %c0_i32_0, %c0_i32_1 : i32, i32, i32, i32
  }
}

</mosaic_0001>

<llo_original>
// kernel: tpu_custom_call.1
$region0: #{tpu_custom_call.1}
  #allocation0 [shape = 'u32[]', space=smem, size = 0x4, offset = 0x4, fixed_abs, tag = 'smem constant byte address 0x4 - core index']
  #allocation1 [shape = 'u32[72,128]{1,0:T(1,128)}', space=vmem, size = 0x9000, scoped, tag = 'internal scratch']
  %s0 = inlined_call_operand.hbm [shape: f32[1,128], index: 0, kind: input, shape index: {}]
  %s1 = inlined_call_operand.hbm [shape: f32[1,128], index: 1, kind: input, shape index: {}]
  %s2 = inlined_call_operand.hbm [shape: f32[1,3,1,128], index: 2, kind: output, shape index: {}]
  %s3 = sld [smem:[#allocation0]]
  $region34: #{tpu_custom_call.1} parent=0
    _
  %s5 = ssub.s32 1, %s3
  %s6 = scalar_select 0, %s5, %s3
  $region1: #{tpu_custom_call.1} parent=0
    #allocation2 [shape = 'u8[512]{0}', space=vmem, size = 0x400, scoped, tag = 'input window, operand 0, single buffered']
    #allocation3 [shape = 's32[1]{0}', space=sflag, size = 0x4, scoped, tag = 'scoped memory for tpu_custom_call.1']
    #allocation4 [shape = 's32[1]{0}', space=sflag, size = 0x4, scoped, tag = 'scoped memory for tpu_custom_call.1']
    #allocation5 [shape = 'u8[512]{0}', space=vmem, size = 0x400, scoped, tag = 'input window, operand 1, single buffered']
    #allocation6 [shape = 's32[1]{0}', space=sflag, size = 0x4, scoped, tag = 'scoped memory for tpu_custom_call.1']
    #allocation7 [shape = 'u8[1536]{0}', space=vmem, size = 0x800, scoped, tag = 'output window, operand 0, single buffered']
    %7 = vsyncpa [#allocation3], 0
    %8 = vsyncpa [#allocation6], 0
    %9 = vsyncpa [#allocation4], 0
    // Predicated region
    $region2: #{tpu_custom_call.1} parent=1 // pred_check
      _
    $region3: #{tpu_custom_call.1} parent=1 // pred_check_branch
      %11 = sbr.rel (0) target = $region5
    $region4: #{tpu_custom_call.1} parent=1 // pred_region
      %s12 = sadd.s32 0, 0
      %p13 = scmp.lt.s32.totalorder %s12, 0
      %s14 = scalar_select %p13, %s12, 0
      %16 = vsyncadd [#allocation3], 0
      %s17 = scalar_lea.hbm %s0, %s14
      %s19 = sshll.u32 %s17, 4
      %s20 = int_to_ptr.hbm [resolvable:$true] %s19
      %s21 = sshll.u32 [#allocation2], 4
      %s22 = int_to_ptr.vmem [resolvable:$true] %s21
      %24 = dma.hbm_to_vmem [thread:$0]  %s20, 16, %s22, [#allocation3]
    $region5: #{tpu_custom_call.1} parent=1 // pred_fallthru
      _
    // Predicated region
    $region6: #{tpu_custom_call.1} parent=1 // pred_check
      _
    $region7: #{tpu_custom_call.1} parent=1 // pred_check_branch
      %26 = sbr.rel (0) target = $region9
    $region8: #{tpu_custom_call.1} parent=1 // pred_region
      %s27 = sadd.s32 0, 0
      %p28 = scmp.lt.s32.totalorder %s27, 0
      %s29 = scalar_select %p28, %s27, 0
      %31 = vsyncadd [#allocation6], 0
      %s32 = scalar_lea.hbm %s1, %s29
      %s34 = sshll.u32 %s32, 4
      %s35 = int_to_ptr.hbm [resolvable:$true] %s34
      %s36 = sshll.u32 [#allocation5], 4
      %s37 = int_to_ptr.vmem [resolvable:$true] %s36
      %39 = dma.hbm_to_vmem [thread:$0]  %s35, 16, %s37, [#allocation6]
    $region9: #{tpu_custom_call.1} parent=1 // pred_fallthru
      _
    // Predicated region
    $region10: #{tpu_custom_call.1} parent=1 // pred_check
      _
    $region11: #{tpu_custom_call.1} parent=1 // pred_check_branch
      %41 = sbr.rel (0) target = $region13
    $region12: #{tpu_custom_call.1} parent=1 // pred_region
      %43 = dma.done [#allocation3], 16
    $region13: #{tpu_custom_call.1} parent=1 // pred_fallthru
      _
    // Predicated region
    $region14: #{tpu_custom_call.1} parent=1 // pred_check
      _
    $region15: #{tpu_custom_call.1} parent=1 // pred_check_branch
      %45 = sbr.rel (0) target = $region17
    $region16: #{tpu_custom_call.1} parent=1 // pred_region
      %47 = dma.done [#allocation6], 16
    $region17: #{tpu_custom_call.1} parent=1 // pred_fallthru
      _
    %s48 = sadd.s32 0, 0
    %p49 = scmp.lt.s32.totalorder %s48, 0
    %s50 = scalar_select %p49, %s48, 0
    %s51 = sadd.s32 0, 0
    %p52 = scmp.lt.s32.totalorder %s51, 0
    %s53 = scalar_select %p52, %s51, 0
    %v54 = vld [vmem:[#allocation2] sm:$0x1]
    %v55 = vld [vmem:[#allocation5] sm:$0x1]
    %vm56 = vcmp.gt.f32.partialorder %v55, 0.0
    %v57 = vsub.f32 1.0, %v54
    %v58 = vsel %vm56, %v54, %v57
    %v59 = vlog2.pop %v58
    %v60 = vmul.f32 %v59, 0.6931472
    %v61 = vmax.f32 %v60, -100.0
    %v62 = vsub.f32 %v54, %v55
    %v63 = vmul.f32 %v62, %v62
    %v64 = vsel %vm56, %v63, 0.0
    %v65 = vsel %vm56, 1, 0
    %v66 = vcvt.s32.f32 %v65
    %v67 = vadd.f32 %v61, 0.0
    %v68 = vadd.f32 %v64, 0.0
    %v69 = vadd.f32 %v66, 0.0
    %p70 = scmp.eq.s32.totalorder 0, 0
    // Predicated region
    $region18: #{tpu_custom_call.1} parent=1 // pred_check
      %p71 = pneg %p70
    $region19: #{tpu_custom_call.1} parent=1 // pred_check_branch
      %73 = sbr.rel (%p71) target = $region21
    $region20: #{tpu_custom_call.1} parent=1 // pred_region
      %74 = vst [vmem:[#allocation7] sm:$0x1] %v67
      %s75 = scalar_lea.vmem [#allocation7], 1
      %76 = vst [vmem:[%s75] sm:$0x1] %v68
      %s77 = scalar_lea.vmem [#allocation7], 2
      %78 = vst [vmem:[%s77] sm:$0x1] %v69
    $region21: #{tpu_custom_call.1} parent=1 // pred_fallthru
      _
    %p79 = scmp.ne.s32.totalorder 0, 0
    // Predicated region
    $region22: #{tpu_custom_call.1} parent=1 // pred_check
      %p80 = pneg %p79
    $region23: #{tpu_custom_call.1} parent=1 // pred_check_branch
      %82 = sbr.rel (%p80) target = $region25
    $region24: #{tpu_custom_call.1} parent=1 // pred_region
      %v83 = vld [vmem:[#allocation7] sm:$0x1]
      %v84 = vadd.f32 %v83, %v67
      %85 = vst [vmem:[#allocation7] sm:$0x1] %v84
      %s86 = scalar_lea.vmem [#allocation7], 1
      %v87 = vld [vmem:[%s86] sm:$0x1]
      %v88 = vadd.f32 %v87, %v68
      %89 = vst [vmem:[%s86] sm:$0x1] %v88
      %s90 = scalar_lea.vmem [#allocation7], 2
      %v91 = vld [vmem:[%s90] sm:$0x1]
      %v92 = vadd.f32 %v91, %v69
      %93 = vst [vmem:[%s90] sm:$0x1] %v92
    $region25: #{tpu_custom_call.1} parent=1 // pred_fallthru
      _
    // Predicated region
    $region26: #{tpu_custom_call.1} parent=1 // pred_check
      _
    $region27: #{tpu_custom_call.1} parent=1 // pred_check_branch
      %95 = sbr.rel (0) target = $region29
    $region28: #{tpu_custom_call.1} parent=1 // pred_region
      %97 = vsyncadd [#allocation4], 0
      %s98 = sshll.u32 [#allocation7], 4
      %s99 = int_to_ptr.vmem [resolvable:$true] %s98
      %s100 = sshll.u32 %s2, 4
      %s101 = int_to_ptr.hbm [resolvable:$true] %s100
      %106 = dma.vmem_to_hbm [thread:$0]  %s99, 48, %s101, [#allocation4], 16, 16, 1
    $region29: #{tpu_custom_call.1} parent=1 // pred_fallthru
      _
    // Predicated region
    $region30: #{tpu_custom_call.1} parent=1 // pred_check
      _
    $region31: #{tpu_custom_call.1} parent=1 // pred_check_branch
      %108 = sbr.rel (0) target = $region33
    $region32: #{tpu_custom_call.1} parent=1 // pred_region
      %110 = dma.done [#allocation4], 48
    $region33: #{tpu_custom_call.1} parent=1 // pred_fallthru
      _
    %111 = vsyncpa [#allocation3], 1
    %112 = vsyncpa [#allocation6], 1
    %113 = vsyncpa [#allocation4], 1

</llo_original>
